<compile_context>
chip_gen: v6e
topology: v6e:2x2x1
jax: 0.10.0
libtpu: 0.0.40
codegen_flags: <defaults>
</compile_context>

<pallas_src>
import functools

import jax
import jax.numpy as jnp
from jax.experimental import pallas as pl
from jax.experimental.pallas import tpu as pltpu


def _rup(n, m):
    return ((n + m - 1) // m) * m


# -----------------------------------------------------------------------------
# One-time parameter packing (hoisted off the forward / latency-critical path).
# -----------------------------------------------------------------------------
def _pack_params(params):
    """Fold Linear0->Linear1 and pack all weights/biases into one f32 slab.

    Slab layout (zero-padded, 128 lanes wide), per layer l with row offset r0:
      rows [r0, r0+fo_p), cols [0, fi_p)  : W_l^T  (fan_out x fan_in)
      rows [r0, r0+fo_p), col  fi_p       : b_l    (fan_out)
    fi_p / fo_p are fan_in / fan_out rounded up to multiples of 8.  Because the
    padding is zero, each layer can contract over the padded row count of the
    previous layer's activations without changing the result.
    """
    (w1, b1), (w2, b2) = params[0], params[1]
    w1 = w1.astype(jnp.float32); b1 = b1.astype(jnp.float32)
    w2 = w2.astype(jnp.float32); b2 = b2.astype(jnp.float32)
    # Exact algebraic fold: there is no activation between Linear0 and Linear1.
    w12 = w1 @ w2
    b12 = b1 @ w2 + b2
    folded = [(w12, b12)] + [(w.astype(jnp.float32), b.astype(jnp.float32))
                             for (w, b) in params[2:]]

    meta = []            # (row_offset, fan_out_padded, fan_in_padded) per layer
    row = 0
    max_cols = 0
    for w, _ in folded:
        fi, fo = w.shape
        fi_p, fo_p = _rup(fi, 8), _rup(fo, 8)
        meta.append((row, fo_p, fi_p))
        row += fo_p
        max_cols = max(max_cols, fi_p + 1)
    n_rows = _rup(row, 8)
    n_cols = _rup(max(max_cols, 128), 128)

    slab = jnp.zeros((n_rows, n_cols), jnp.float32)
    for (w, b), (r0, _fo_p, fi_p) in zip(folded, meta):
        fi, fo = w.shape
        slab = slab.at[r0:r0 + fo, 0:fi].set(w.T)
        slab = slab.at[r0:r0 + fo, fi_p].set(b)

    n_latent = params[0][0].shape[0]
    n_out = params[-1][0].shape[1]
    return slab, tuple(meta), n_latent, n_out


# -----------------------------------------------------------------------------
# Kernel: activations ride feature-major, batch on the 128-lane axis.
# -----------------------------------------------------------------------------
def _decoder_kernel(zt_ref, slab_ref, out_ref, *, meta):
    """zt_ref: (n_latent_pad, tb); slab_ref: packed weights; out_ref: (n_out_pad, tb)."""
    x = zt_ref[...]                                        # (fi_p0, tb) f32
    n_layers = len(meta)
    for li, (r0, fo_p, fi_p) in enumerate(meta):
        wt = slab_ref[r0:r0 + fo_p, 0:fi_p]                # (fo_p, fi_p), zero-padded
        b = slab_ref[r0:r0 + fo_p, fi_p:fi_p + 1]          # (fo_p, 1)
        x = jnp.dot(wt, x, preferred_element_type=jnp.float32) + b
        if li < n_layers - 1:                              # LeakyReLU(0.2) on hidden layers
            x = jnp.maximum(x, 0.2 * x)
    out_ref[...] = x                                       # lane-dense store


# -----------------------------------------------------------------------------
# Forward builder: packs params once, returns a jitted forward(z) -> (B, n_out).
# -----------------------------------------------------------------------------
def build_decoder_forward(params, *, max_batch_tile=1024):
    slab, meta, n_latent, n_out = _pack_params(params)
    n_lat_pad = meta[0][2]
    n_out_pad = meta[-1][1]
    kernel = functools.partial(_decoder_kernel, meta=meta)

    @jax.jit
    def forward(z):
        B = z.shape[0]
        # Batch rides the lane axis: pad to a multiple of 128.  For larger
        # batches keep >=2 grid steps so both v7x TensorCores get work.
        b_pad0 = _rup(B, 128)
        if b_pad0 >= 256:
            tb = min(max_batch_tile, _rup(b_pad0 // 2, 128))
        else:
            tb = b_pad0
        b_pad = _rup(b_pad0, tb)
        grid = (b_pad // tb,)

        # Layout plumbing (transpose + zero-pad) stays in the wrapper.
        zt = jnp.pad(z.astype(jnp.float32).T,
                     ((0, n_lat_pad - n_latent), (0, b_pad - B)))

        out_t = pl.pallas_call(
            kernel,
            out_shape=jax.ShapeDtypeStruct((n_out_pad, b_pad), jnp.float32),
            grid=grid,
            in_specs=[
                pl.BlockSpec((n_lat_pad, tb), lambda i: (0, i)),   # activations
                pl.BlockSpec(slab.shape, lambda i: (0, 0)),        # weight slab, VMEM-resident
            ],
            out_specs=pl.BlockSpec((n_out_pad, tb), lambda i: (0, i)),
            compiler_params=pltpu.CompilerParams(
                dimension_semantics=("parallel",)),
        )(zt, slab)

        # Back to batch-major; nn.Unflatten(1, [n_out]) on 2-D output is an identity.
        return out_t[:n_out, :B].T

    return forward


# -----------------------------------------------------------------------------
# Synthetic init + pure-JAX reference (matches the PyTorch module exactly).
# -----------------------------------------------------------------------------
def init_params(key, n_latent_dims=8, n_hidden=4, n_hidden_layers=3,
                n_output_features=16):
    """Weights stored as (in_features, out_features)."""
    dims = [(n_latent_dims, n_hidden)]
    dims += [(n_hidden, n_hidden)] * n_hidden_layers
    dims += [(n_hidden, n_output_features)]
    params = []
    for fan_in, fan_out in dims:
        key, kw, kb = jax.random.split(key, 3)
        bound = float(jnp.sqrt(6.0 / fan_in))
        w = jax.random.uniform(kw, (fan_in, fan_out), jnp.float32, -bound, bound)
        bb = 1.0 / float(jnp.sqrt(fan_in))
        b = jax.random.uniform(kb, (fan_out,), jnp.float32, -bb, bb)
        params.append((w, b))
    return params


def decoder_ref(z, params):
    """Layer-by-layer reference (no fold), matching the PyTorch Sequential."""
    x = z.astype(jnp.float32)
    w, b = params[0]
    x = x @ w + b                       # first Linear: no activation after it
    for w, b in params[1:-1]:
        x = x @ w + b
        x = jnp.where(x > 0, x, 0.2 * x)
    w, b = params[-1]
    return x @ w + b


if __name__ == "__main__":
    key = jax.random.PRNGKey(0)
    key, kz = jax.random.split(key)

    B = 8
    n_latent_dims = 8
    n_hidden = 4
    n_hidden_layers = 3
    n_output_features = 16

    z = jax.random.normal(kz, (B, n_latent_dims), jnp.float32)
    params = init_params(key, n_latent_dims, n_hidden, n_hidden_layers,
                         n_output_features)

    forward = build_decoder_forward(params)
    out = jax.block_until_ready(forward(z))

    ref = decoder_ref(z, params)
    assert out.shape == (B, n_output_features)
    # Note: the L0->L1 fold changes FP association vs. the reference (ULP-level).
    assert jnp.allclose(out, ref, atol=1e-5, rtol=1e-4), \
        "Pallas output mismatch vs reference"

    print("KERNEL_OK")
</pallas_src>

<mosaic_0001>
module attributes {stable_mosaic.version = 11 : i64} {
  func.func @_decoder_kernel(%arg0: i32, %arg1: memref<8x128xf32, #tpu.memory_space<vmem>>, %arg2: memref<40x128xf32, #tpu.memory_space<vmem>>, %arg3: memref<16x128xf32, #tpu.memory_space<vmem>>) attributes {dimension_semantics = [#tpu.dimension_semantics<parallel>], iteration_bounds = array<i64: 1>, scalar_prefetch = 0 : i64, scratch_operands = 0 : i64, tpu.core_type = #tpu.core_type<tc>, window_params = [{transform_indices = @transform_0, window_bounds = array<i64: 8, 128>}, {pipeline_mode = #tpu.pipeline_mode<synchronous>, transform_indices = @transform_1, window_bounds = array<i64: 40, 128>}, {transform_indices = @transform_2, window_bounds = array<i64: 16, 128>}]} {
    %c0 = arith.constant 0 : index
    %c0_0 = arith.constant 0 : index
    %0 = vector.load %arg1[%c0, %c0_0] : memref<8x128xf32, #tpu.memory_space<vmem>>, vector<8x128xf32>
    %c0_1 = arith.constant 0 : index
    %c0_2 = arith.constant 0 : index
    %1 = vector.load %arg2[%c0_1, %c0_2] : memref<40x128xf32, #tpu.memory_space<vmem>>, vector<8x8xf32>
    %c0_3 = arith.constant 0 : index
    %c8 = arith.constant 8 : index
    %2 = vector.load %arg2[%c0_3, %c8] : memref<40x128xf32, #tpu.memory_space<vmem>>, vector<8x1xf32>
    %cst = arith.constant dense<0.000000e+00> : vector<8x128xf32>
    %3 = tpu.matmul %1, %0, %cst {dimension_numbers = #tpu.dot_dimension_numbers<[1], [0], [0], [1], [0, 0, 1, 1], [], []>} : vector<8x8xf32>, vector<8x128xf32>, vector<8x128xf32> -> vector<8x128xf32>
    %4 = vector.broadcast %2 : vector<8x1xf32> to vector<8x128xf32>
    %5 = arith.addf %3, %4 : vector<8x128xf32>
    %cst_4 = arith.constant 2.000000e-01 : f32
    %6 = vector.broadcast %cst_4 : f32 to vector<8x128xf32>
    %7 = arith.mulf %6, %5 : vector<8x128xf32>
    %8 = arith.maximumf %5, %7 : vector<8x128xf32>
    %c8_5 = arith.constant 8 : index
    %c0_6 = arith.constant 0 : index
    %9 = vector.load %arg2[%c8_5, %c0_6] : memref<40x128xf32, #tpu.memory_space<vmem>>, vector<8x8xf32>
    %c8_7 = arith.constant 8 : index
    %c8_8 = arith.constant 8 : index
    %10 = vector.load %arg2[%c8_7, %c8_8] : memref<40x128xf32, #tpu.memory_space<vmem>>, vector<8x1xf32>
    %cst_9 = arith.constant dense<0.000000e+00> : vector<8x128xf32>
    %11 = tpu.matmul %9, %8, %cst_9 {dimension_numbers = #tpu.dot_dimension_numbers<[1], [0], [0], [1], [0, 0, 1, 1], [], []>} : vector<8x8xf32>, vector<8x128xf32>, vector<8x128xf32> -> vector<8x128xf32>
    %12 = vector.broadcast %10 : vector<8x1xf32> to vector<8x128xf32>
    %13 = arith.addf %11, %12 : vector<8x128xf32>
    %cst_10 = arith.constant 2.000000e-01 : f32
    %14 = vector.broadcast %cst_10 : f32 to vector<8x128xf32>
    %15 = arith.mulf %14, %13 : vector<8x128xf32>
    %16 = arith.maximumf %13, %15 : vector<8x128xf32>
    %c16 = arith.constant 16 : index
    %c0_11 = arith.constant 0 : index
    %17 = vector.load %arg2[%c16, %c0_11] : memref<40x128xf32, #tpu.memory_space<vmem>>, vector<8x8xf32>
    %c16_12 = arith.constant 16 : index
    %c8_13 = arith.constant 8 : index
    %18 = vector.load %arg2[%c16_12, %c8_13] : memref<40x128xf32, #tpu.memory_space<vmem>>, vector<8x1xf32>
    %cst_14 = arith.constant dense<0.000000e+00> : vector<8x128xf32>
    %19 = tpu.matmul %17, %16, %cst_14 {dimension_numbers = #tpu.dot_dimension_numbers<[1], [0], [0], [1], [0, 0, 1, 1], [], []>} : vector<8x8xf32>, vector<8x128xf32>, vector<8x128xf32> -> vector<8x128xf32>
    %20 = vector.broadcast %18 : vector<8x1xf32> to vector<8x128xf32>
    %21 = arith.addf %19, %20 : vector<8x128xf32>
    %cst_15 = arith.constant 2.000000e-01 : f32
    %22 = vector.broadcast %cst_15 : f32 to vector<8x128xf32>
    %23 = arith.mulf %22, %21 : vector<8x128xf32>
    %24 = arith.maximumf %21, %23 : vector<8x128xf32>
    %c24 = arith.constant 24 : index
    %c0_16 = arith.constant 0 : index
    %25 = vector.load %arg2[%c24, %c0_16] : memref<40x128xf32, #tpu.memory_space<vmem>>, vector<16x8xf32>
    %c24_17 = arith.constant 24 : index
    %c8_18 = arith.constant 8 : index
    %26 = vector.load %arg2[%c24_17, %c8_18] : memref<40x128xf32, #tpu.memory_space<vmem>>, vector<16x1xf32>
    %cst_19 = arith.constant dense<0.000000e+00> : vector<16x128xf32>
    %27 = tpu.matmul %25, %24, %cst_19 {dimension_numbers = #tpu.dot_dimension_numbers<[1], [0], [0], [1], [0, 0, 1, 1], [], []>} : vector<16x8xf32>, vector<8x128xf32>, vector<16x128xf32> -> vector<16x128xf32>
    %28 = vector.broadcast %26 : vector<16x1xf32> to vector<16x128xf32>
    %29 = arith.addf %27, %28 : vector<16x128xf32>
    %c0_20 = arith.constant 0 : index
    %c0_21 = arith.constant 0 : index
    %30 = vector.load %arg3[%c0_20, %c0_21] : memref<16x128xf32, #tpu.memory_space<vmem>>, vector<16x128xf32>
    tpu.vector_store %arg3[%c0_20, %c0_21], %29 {strides = array<i32>} : memref<16x128xf32, #tpu.memory_space<vmem>>, vector<16x128xf32>,
    return
  }
  func.func @transform_0(%arg0: i32) -> (i32, i32) {
    %c0_i32 = arith.constant 0 : i32
    %c0_i32_0 = arith.constant 0 : i32
    return %c0_i32, %arg0 : i32, i32
  }
  func.func @transform_1(%arg0: i32) -> (i32, i32) {
    %c0_i32 = arith.constant 0 : i32
    %c0_i32_0 = arith.constant 0 : i32
    %c0_i32_1 = arith.constant 0 : i32
    return %c0_i32, %c0_i32_0 : i32, i32
  }
  func.func @transform_2(%arg0: i32) -> (i32, i32) {
    %c0_i32 = arith.constant 0 : i32
    %c0_i32_0 = arith.constant 0 : i32
    return %c0_i32, %arg0 : i32, i32
  }
}

</mosaic_0001>

<llo_original>
// kernel: forward.1
$region0: #{forward.1}
  #allocation0 [shape = 'u32[]', space=smem, size = 0x4, offset = 0x4, fixed_abs, tag = 'smem constant byte address 0x4 - core index']
  #allocation1 [shape = 'u32[144,128]{1,0:T(1,128)}', space=vmem, size = 0x12000, scoped, tag = 'internal scratch']
  %s0 = inlined_call_operand.vmem [shape: f32[8,128], index: 0, kind: input, shape index: {}]
  %s1 = inlined_call_operand.hbm [shape: f32[40,128], index: 1, kind: input, shape index: {}]
  %s2 = inlined_call_operand.vmem [shape: f32[16,128], index: 2, kind: output, shape index: {}]
  %s3 = sld [smem:[#allocation0]]
  $region22: #{forward.1} parent=0
    _
  %s5 = ssub.s32 1, %s3
  %s6 = scalar_select 0, %s5, %s3
  $region1: #{forward.1} parent=0
    #allocation2 [shape = 'u8[20480]{0}', space=vmem, size = 0x5000, scoped, tag = 'input window, operand 1, single buffered']
    #allocation3 [shape = 's32[1]{0}', space=sflag, size = 0x4, scoped, tag = 'scoped memory for forward.1']
    %7 = vsyncpa [#allocation3], 0
    // Predicated region
    $region2: #{forward.1} parent=1 // pred_check
      _
    $region3: #{forward.1} parent=1 // pred_check_branch
      %9 = sbr.rel (0) target = $region5
    $region4: #{forward.1} parent=1 // pred_region
      _
    $region5: #{forward.1} parent=1 // pred_fallthru
      _
    // Predicated region
    $region6: #{forward.1} parent=1 // pred_check
      _
    $region7: #{forward.1} parent=1 // pred_check_branch
      %11 = sbr.rel (0) target = $region9
    $region8: #{forward.1} parent=1 // pred_region
      %s13 = ssub.s32 640, 640
      %14 = vsyncadd [#allocation3], %s13
      %s15 = sshll.u32 [#allocation2], 4
      %s16 = int_to_ptr.vmem [resolvable:$true] %s15
      %21 = dma.hbm_to_vmem [thread:$0]  %s1, 640, %s16, [#allocation3], 128, 128, 8
    $region9: #{forward.1} parent=1 // pred_fallthru
      _
    // Predicated region
    $region10: #{forward.1} parent=1 // pred_check
      _
    $region11: #{forward.1} parent=1 // pred_check_branch
      %23 = sbr.rel (0) target = $region13
    $region12: #{forward.1} parent=1 // pred_region
      %24 = dma.done [#allocation3], 640
    $region13: #{forward.1} parent=1 // pred_fallthru
      _
    %v25 = vld [vmem:[%s0] sm:$0xff]
    %v26 = vld [vmem:[#allocation2] sm:$0xff]
    %28 = vset.pattern.permute.xlu0 8
    %29 = vperm.xlu0 %28, %v26
    %v30 = vpop.permute.xlu0 %29
    %vm32 = vcmask 64512
    %v33 = vsel %vm32, %v26, 0
    %35 = vmatprep.subr.mxu0 0.0
    %36 = vmatpush1.msra.mxu0 0.0
    %37 = vmatprep.subr.mxu0 0.0
    %38 = vmatpush1.msra.mxu0 0.0
    %39 = vmatprep.subr.mxu0 0.0
    %40 = vmatpush1.msra.mxu0 0.0
    %41 = vmatprep.subr.mxu0 0.0
    %42 = vmatpush1.msra.mxu0 0.0
    %43 = vmatprep.subr.mxu0 0.0
    %44 = vmatpush1.msra.mxu0 0.0
    %45 = vmatprep.subr.mxu0 0.0
    %46 = vmatpush1.msra.mxu0 0.0
    %47 = vmatprep.subr.mxu0 0.0
    %48 = vmatpush1.msra.mxu0 0.0
    %49 = vmatprep.subr.mxu0 0.0
    %50 = vmatpush1.msra.mxu0 0.0
    %51 = vmatprep.subr.mxu0 0.0
    %52 = vmatpush1.msra.mxu0 0.0
    %53 = vmatprep.subr.mxu0 0.0
    %54 = vmatpush1.msra.mxu0 0.0
    %55 = vmatprep.subr.mxu0 0.0
    %56 = vmatpush1.msra.mxu0 0.0
    %57 = vmatprep.subr.mxu0 0.0
    %58 = vmatpush1.msra.mxu0 0.0
    %59 = vmatprep.subr.mxu0 0.0
    %60 = vmatpush1.msra.mxu0 0.0
    %61 = vmatprep.subr.mxu0 0.0
    %62 = vmatpush1.msra.mxu0 0.0
    %63 = vmatprep.subr.mxu0 0.0
    %64 = vmatpush1.msra.mxu0 0.0
    %65 = vmatprep.subr.mxu0 0.0
    %66 = vmatpush1.msra.mxu0 %v25
    %67 = vmatprep.subr.mxu0 0.0
    %68 = vmatpush2.msra.mxu0 0.0
    %69 = vmatprep.subr.mxu0 0.0
    %70 = vmatpush2.msra.mxu0 0.0
    %71 = vmatprep.subr.mxu0 0.0
    %72 = vmatpush2.msra.mxu0 0.0
    %73 = vmatprep.subr.mxu0 0.0
    %74 = vmatpush2.msra.mxu0 0.0
    %75 = vmatprep.subr.mxu0 0.0
    %76 = vmatpush2.msra.mxu0 0.0
    %77 = vmatprep.subr.mxu0 0.0
    %78 = vmatpush2.msra.mxu0 0.0
    %79 = vmatprep.subr.mxu0 0.0
    %80 = vmatpush2.msra.mxu0 0.0
    %81 = vmatprep.subr.mxu0 0.0
    %82 = vmatpush2.msra.mxu0 0.0
    %83 = vmatprep.subr.mxu0 0.0
    %84 = vmatpush2.msra.mxu0 0.0
    %85 = vmatprep.subr.mxu0 0.0
    %86 = vmatpush2.msra.mxu0 0.0
    %87 = vmatprep.subr.mxu0 0.0
    %88 = vmatpush2.msra.mxu0 0.0
    %89 = vmatprep.subr.mxu0 0.0
    %90 = vmatpush2.msra.mxu0 0.0
    %91 = vmatprep.subr.mxu0 0.0
    %92 = vmatpush2.msra.mxu0 0.0
    %93 = vmatprep.subr.mxu0 0.0
    %94 = vmatpush2.msra.mxu0 0.0
    %95 = vmatprep.subr.mxu0 0.0
    %96 = vmatpush2.msra.mxu0 0.0
    %97 = vmatprep.subr.mxu0 0.0
    %98 = vmatpush2.msra.mxu0 0.0
    %99 = vmatprep.mubr.f32.mxu0 0.0
    %100 = vmatmul.mubr.f32.gmra.mxu0 %v33
    %v101 = vpop.f32.mrf.mxu0
    %v102 = vadd.f32 %v30, %v101
    %v103 = vpop.f32.mrf.mxu0
    %104 = vdwg.mxu0
    %v105 = vmul.f32 %v102, 0.2
    %v106 = vmax.f32 %v102, %v105
    %v107 = vld [vmem:[#allocation2 + $0x8] sm:$0xff]
    %109 = vset.pattern.permute.xlu0 8
    %110 = vperm.xlu0 %109, %v107
    %v111 = vpop.permute.xlu0 %110
    %v113 = vsel %vm32, %v107, 0
    %115 = vmatprep.subr.mxu0 0.0
    %116 = vmatpush1.msra.mxu0 0.0
    %117 = vmatprep.subr.mxu0 0.0
    %118 = vmatpush1.msra.mxu0 0.0
    %119 = vmatprep.subr.mxu0 0.0
    %120 = vmatpush1.msra.mxu0 0.0
    %121 = vmatprep.subr.mxu0 0.0
    %122 = vmatpush1.msra.mxu0 0.0
    %123 = vmatprep.subr.mxu0 0.0
    %124 = vmatpush1.msra.mxu0 0.0
    %125 = vmatprep.subr.mxu0 0.0
    %126 = vmatpush1.msra.mxu0 0.0
    %127 = vmatprep.subr.mxu0 0.0
    %128 = vmatpush1.msra.mxu0 0.0
    %129 = vmatprep.subr.mxu0 0.0
    %130 = vmatpush1.msra.mxu0 0.0
    %131 = vmatprep.subr.mxu0 0.0
    %132 = vmatpush1.msra.mxu0 0.0
    %133 = vmatprep.subr.mxu0 0.0
    %134 = vmatpush1.msra.mxu0 0.0
    %135 = vmatprep.subr.mxu0 0.0
    %136 = vmatpush1.msra.mxu0 0.0
    %137 = vmatprep.subr.mxu0 0.0
    %138 = vmatpush1.msra.mxu0 0.0
    %139 = vmatprep.subr.mxu0 0.0
    %140 = vmatpush1.msra.mxu0 0.0
    %141 = vmatprep.subr.mxu0 0.0
    %142 = vmatpush1.msra.mxu0 0.0
    %143 = vmatprep.subr.mxu0 0.0
    %144 = vmatpush1.msra.mxu0 0.0
    %145 = vmatprep.subr.mxu0 0.0
    %146 = vmatpush1.msra.mxu0 %v106
    %147 = vmatprep.subr.mxu0 0.0
    %148 = vmatpush2.msra.mxu0 0.0
    %149 = vmatprep.subr.mxu0 0.0
    %150 = vmatpush2.msra.mxu0 0.0
    %151 = vmatprep.subr.mxu0 0.0
    %152 = vmatpush2.msra.mxu0 0.0
    %153 = vmatprep.subr.mxu0 0.0
    %154 = vmatpush2.msra.mxu0 0.0
    %155 = vmatprep.subr.mxu0 0.0
    %156 = vmatpush2.msra.mxu0 0.0
    %157 = vmatprep.subr.mxu0 0.0
    %158 = vmatpush2.msra.mxu0 0.0
    %159 = vmatprep.subr.mxu0 0.0
    %160 = vmatpush2.msra.mxu0 0.0
    %161 = vmatprep.subr.mxu0 0.0
    %162 = vmatpush2.msra.mxu0 0.0
    %163 = vmatprep.subr.mxu0 0.0
    %164 = vmatpush2.msra.mxu0 0.0
    %165 = vmatprep.subr.mxu0 0.0
    %166 = vmatpush2.msra.mxu0 0.0
    %167 = vmatprep.subr.mxu0 0.0
    %168 = vmatpush2.msra.mxu0 0.0
    %169 = vmatprep.subr.mxu0 0.0
    %170 = vmatpush2.msra.mxu0 0.0
    %171 = vmatprep.subr.mxu0 0.0
    %172 = vmatpush2.msra.mxu0 0.0
    %173 = vmatprep.subr.mxu0 0.0
    %174 = vmatpush2.msra.mxu0 0.0
    %175 = vmatprep.subr.mxu0 0.0
    %176 = vmatpush2.msra.mxu0 0.0
    %177 = vmatprep.subr.mxu0 0.0
    %178 = vmatpush2.msra.mxu0 0.0
    %179 = vmatprep.mubr.f32.mxu0 0.0
    %180 = vmatmul.mubr.f32.gmra.mxu0 %v113
    %v181 = vpop.f32.mrf.mxu0
    %v182 = vadd.f32 %v111, %v181
    %v183 = vpop.f32.mrf.mxu0
    %184 = vdwg.mxu0
    %v185 = vmul.f32 %v182, 0.2
    %v186 = vmax.f32 %v182, %v185
    %v187 = vld [vmem:[#allocation2 + $0x10] sm:$0xff]
    %189 = vset.pattern.permute.xlu0 8
    %190 = vperm.xlu0 %189, %v187
    %v191 = vpop.permute.xlu0 %190
    %v193 = vsel %vm32, %v187, 0
    %195 = vmatprep.subr.mxu0 0.0
    %196 = vmatpush1.msra.mxu0 0.0
    %197 = vmatprep.subr.mxu0 0.0
    %198 = vmatpush1.msra.mxu0 0.0
    %199 = vmatprep.subr.mxu0 0.0
    %200 = vmatpush1.msra.mxu0 0.0
    %201 = vmatprep.subr.mxu0 0.0
    %202 = vmatpush1.msra.mxu0 0.0
    %203 = vmatprep.subr.mxu0 0.0
    %204 = vmatpush1.msra.mxu0 0.0
    %205 = vmatprep.subr.mxu0 0.0
    %206 = vmatpush1.msra.mxu0 0.0
    %207 = vmatprep.subr.mxu0 0.0
    %208 = vmatpush1.msra.mxu0 0.0
    %209 = vmatprep.subr.mxu0 0.0
    %210 = vmatpush1.msra.mxu0 0.0
    %211 = vmatprep.subr.mxu0 0.0
    %212 = vmatpush1.msra.mxu0 0.0
    %213 = vmatprep.subr.mxu0 0.0
    %214 = vmatpush1.msra.mxu0 0.0
    %215 = vmatprep.subr.mxu0 0.0
    %216 = vmatpush1.msra.mxu0 0.0
    %217 = vmatprep.subr.mxu0 0.0
    %218 = vmatpush1.msra.mxu0 0.0
    %219 = vmatprep.subr.mxu0 0.0
    %220 = vmatpush1.msra.mxu0 0.0
    %221 = vmatprep.subr.mxu0 0.0
    %222 = vmatpush1.msra.mxu0 0.0
    %223 = vmatprep.subr.mxu0 0.0
    %224 = vmatpush1.msra.mxu0 0.0
    %225 = vmatprep.subr.mxu0 0.0
    %226 = vmatpush1.msra.mxu0 %v186
    %227 = vmatprep.subr.mxu0 0.0
    %228 = vmatpush2.msra.mxu0 0.0
    %229 = vmatprep.subr.mxu0 0.0
    %230 = vmatpush2.msra.mxu0 0.0
    %231 = vmatprep.subr.mxu0 0.0
    %232 = vmatpush2.msra.mxu0 0.0
    %233 = vmatprep.subr.mxu0 0.0
    %234 = vmatpush2.msra.mxu0 0.0
    %235 = vmatprep.subr.mxu0 0.0
    %236 = vmatpush2.msra.mxu0 0.0
    %237 = vmatprep.subr.mxu0 0.0
    %238 = vmatpush2.msra.mxu0 0.0
    %239 = vmatprep.subr.mxu0 0.0
    %240 = vmatpush2.msra.mxu0 0.0
    %241 = vmatprep.subr.mxu0 0.0
    %242 = vmatpush2.msra.mxu0 0.0
    %243 = vmatprep.subr.mxu0 0.0
    %244 = vmatpush2.msra.mxu0 0.0
    %245 = vmatprep.subr.mxu0 0.0
    %246 = vmatpush2.msra.mxu0 0.0
    %247 = vmatprep.subr.mxu0 0.0
    %248 = vmatpush2.msra.mxu0 0.0
    %249 = vmatprep.subr.mxu0 0.0
    %250 = vmatpush2.msra.mxu0 0.0
    %251 = vmatprep.subr.mxu0 0.0
    %252 = vmatpush2.msra.mxu0 0.0
    %253 = vmatprep.subr.mxu0 0.0
    %254 = vmatpush2.msra.mxu0 0.0
    %255 = vmatprep.subr.mxu0 0.0
    %256 = vmatpush2.msra.mxu0 0.0
    %257 = vmatprep.subr.mxu0 0.0
    %258 = vmatpush2.msra.mxu0 0.0
    %259 = vmatprep.mubr.f32.mxu0 0.0
    %260 = vmatmul.mubr.f32.gmra.mxu0 %v193
    %v261 = vpop.f32.mrf.mxu0
    %v262 = vadd.f32 %v191, %v261
    %v263 = vpop.f32.mrf.mxu0
    %264 = vdwg.mxu0
    %v265 = vmul.f32 %v262, 0.2
    %v266 = vmax.f32 %v262, %v265
    %v267 = vld [vmem:[#allocation2 + $0x18] sm:$0xff]
    %v268 = vld [vmem:[#allocation2 + $0x20] sm:$0xff]
    %270 = vset.pattern.permute.xlu0 8
    %271 = vperm.xlu0 %270, %v267
    %v272 = vpop.permute.xlu0 %271
    %275 = vset.pattern.permute.xlu0 8
    %276 = vperm.xlu0 %275, %v268
    %v277 = vpop.permute.xlu0 %276
    %v279 = vsel %vm32, %v267, 0
    %v281 = vsel %vm32, %v268, 0
    %283 = vmatprep.subr.mxu0 0.0
    %284 = vmatpush1.msra.mxu0 0.0
    %285 = vmatprep.subr.mxu0 0.0
    %286 = vmatpush1.msra.mxu0 0.0
    %287 = vmatprep.subr.mxu0 0.0
    %288 = vmatpush1.msra.mxu0 0.0
    %289 = vmatprep.subr.mxu0 0.0
    %290 = vmatpush1.msra.mxu0 0.0
    %291 = vmatprep.subr.mxu0 0.0
    %292 = vmatpush1.msra.mxu0 0.0
    %293 = vmatprep.subr.mxu0 0.0
    %294 = vmatpush1.msra.mxu0 0.0
    %295 = vmatprep.subr.mxu0 0.0
    %296 = vmatpush1.msra.mxu0 0.0
    %297 = vmatprep.subr.mxu0 0.0
    %298 = vmatpush1.msra.mxu0 0.0
    %299 = vmatprep.subr.mxu0 0.0
    %300 = vmatpush1.msra.mxu0 0.0
    %301 = vmatprep.subr.mxu0 0.0
    %302 = vmatpush1.msra.mxu0 0.0
    %303 = vmatprep.subr.mxu0 0.0
    %304 = vmatpush1.msra.mxu0 0.0
    %305 = vmatprep.subr.mxu0 0.0
    %306 = vmatpush1.msra.mxu0 0.0
    %307 = vmatprep.subr.mxu0 0.0
    %308 = vmatpush1.msra.mxu0 0.0
    %309 = vmatprep.subr.mxu0 0.0
    %310 = vmatpush1.msra.mxu0 0.0
    %311 = vmatprep.subr.mxu0 0.0
    %312 = vmatpush1.msra.mxu0 0.0
    %313 = vmatprep.subr.mxu0 0.0
    %314 = vmatpush1.msra.mxu0 %v266
    %315 = vmatprep.subr.mxu0 0.0
    %316 = vmatpush2.msra.mxu0 0.0
    %317 = vmatprep.subr.mxu0 0.0
    %318 = vmatpush2.msra.mxu0 0.0
    %319 = vmatprep.subr.mxu0 0.0
    %320 = vmatpush2.msra.mxu0 0.0
    %321 = vmatprep.subr.mxu0 0.0
    %322 = vmatpush2.msra.mxu0 0.0
    %323 = vmatprep.subr.mxu0 0.0
    %324 = vmatpush2.msra.mxu0 0.0
    %325 = vmatprep.subr.mxu0 0.0
    %326 = vmatpush2.msra.mxu0 0.0
    %327 = vmatprep.subr.mxu0 0.0
    %328 = vmatpush2.msra.mxu0 0.0
    %329 = vmatprep.subr.mxu0 0.0
    %330 = vmatpush2.msra.mxu0 0.0
    %331 = vmatprep.subr.mxu0 0.0
    %332 = vmatpush2.msra.mxu0 0.0
    %333 = vmatprep.subr.mxu0 0.0
    %334 = vmatpush2.msra.mxu0 0.0
    %335 = vmatprep.subr.mxu0 0.0
    %336 = vmatpush2.msra.mxu0 0.0
    %337 = vmatprep.subr.mxu0 0.0
    %338 = vmatpush2.msra.mxu0 0.0
    %339 = vmatprep.subr.mxu0 0.0
    %340 = vmatpush2.msra.mxu0 0.0
    %341 = vmatprep.subr.mxu0 0.0
    %342 = vmatpush2.msra.mxu0 0.0
    %343 = vmatprep.subr.mxu0 0.0
    %344 = vmatpush2.msra.mxu0 0.0
    %345 = vmatprep.subr.mxu0 0.0
    %346 = vmatpush2.msra.mxu0 0.0
    %347 = vmatprep.mubr.f32.mxu0 0.0
    %348 = vmatmul.mubr.f32.gmra.mxu0 %v279
    %v349 = vpop.f32.mrf.mxu0
    %v350 = vadd.f32 %v272, %v349
    %v351 = vpop.f32.mrf.mxu0
    %352 = vmatprep.mubr.f32.mxu0 0.0
    %353 = vmatmul.mubr.f32.gmra.mxu0 %v281
    %v354 = vpop.f32.mrf.mxu0
    %v355 = vadd.f32 %v277, %v354
    %v356 = vpop.f32.mrf.mxu0
    %357 = vdwg.mxu0
    %358 = vst [vmem:[%s2] sm:$0xff] %v350
    %359 = vst [vmem:[%s2 + $0x8] sm:$0xff] %v355
    // Predicated region
    $region14: #{forward.1} parent=1 // pred_check
      _
    $region15: #{forward.1} parent=1 // pred_check_branch
      %361 = sbr.rel (0) target = $region17
    $region16: #{forward.1} parent=1 // pred_region
      _
    $region17: #{forward.1} parent=1 // pred_fallthru
      _
    // Predicated region
    $region18: #{forward.1} parent=1 // pred_check
      _
    $region19: #{forward.1} parent=1 // pred_check_branch
      %363 = sbr.rel (0) target = $region21
    $region20: #{forward.1} parent=1 // pred_region
      _
    $region21: #{forward.1} parent=1 // pred_fallthru
      _
    %364 = vsyncpa [#allocation3], 1

</llo_original>
